<compile_context>
chip_gen: v7x
topology: tpu7x:2x2x1
jax: 0.10.0
libtpu: 0.0.40
codegen_flags: <defaults>
</compile_context>

<pallas_src>
import jax
import jax.numpy as jnp
from jax import lax
from jax.experimental import pallas as pl
from jax.experimental.pallas import tpu as pltpu


def _embbag_fc_kernel(text_ref, starts_ref, ends_ref, emb_ref, w_ref, b_ref, out_ref):
    """EmbeddingBag(mode='mean') + Linear, fully vectorized on the MXU/VPU."""
    N = text_ref.shape[0]
    V = emb_ref.shape[0]
    B = starts_ref.shape[0]

    # --- One-hot gather on the MXU: onehot (N, V) @ emb (V, Dp) -> gathered (N, Dp) ---
    tok = text_ref[...]                                         # (N, 1) int32
    vocab_iota = lax.broadcasted_iota(jnp.int32, (N, V), 1)     # lane iota over vocab
    onehot = (vocab_iota == tok).astype(jnp.float32)            # (N, V)
    gathered = jnp.dot(onehot, emb_ref[...],
                       preferred_element_type=jnp.float32)      # (N, Dp)

    # --- Segment-mean matrix S (B, N): row b selects [starts[b], ends[b]) * 1/count ---
    pos = lax.broadcasted_iota(jnp.int32, (B, N), 1)            # (B, N)
    starts = starts_ref[...]                                    # (B, 1)
    ends = ends_ref[...]                                        # (B, 1)
    counts = (ends - starts).astype(jnp.float32)                # (B, 1)
    # Empty bag -> inv = 0 -> zero row -> zero output (matches PyTorch 'mean').
    inv = jnp.where(counts > 0, 1.0, 0.0) / jnp.maximum(counts, 1.0)
    seg = jnp.logical_and(pos >= starts, pos < ends).astype(jnp.float32)
    S = seg * inv                                               # (B, N)

    bags = jnp.dot(S, gathered, preferred_element_type=jnp.float32)   # (B, Dp)

    # --- fc: (B, Dp) @ (Dp, C) + (1, C) ---
    out_ref[...] = (
        jnp.dot(bags, w_ref[...], preferred_element_type=jnp.float32) + b_ref[...]
    )


def text_classification_forward(text, offsets, emb_table, fc_w_t, fc_b):
    """text: (N,) int32, offsets: (B,) int32 starting offsets (PyTorch semantics)."""
    N = text.shape[0]
    B = offsets.shape[0]
    V, D = emb_table.shape
    C = fc_w_t.shape[1]

    # Lane-dense feature dim: zero-pad D up to a multiple of 128.
    Dp = max(128, ((D + 127) // 128) * 128)
    emb_p = jnp.zeros((V, Dp), jnp.float32).at[:, :D].set(emb_table.astype(jnp.float32))
    w_p = jnp.zeros((Dp, C), jnp.float32).at[:D, :].set(fc_w_t.astype(jnp.float32))

    text2d = text.astype(jnp.int32).reshape(N, 1)
    starts = offsets.astype(jnp.int32).reshape(B, 1)
    ends = jnp.concatenate(
        [offsets[1:].astype(jnp.int32), jnp.array([N], dtype=jnp.int32)]
    ).reshape(B, 1)

    return pl.pallas_call(
        _embbag_fc_kernel,
        out_shape=jax.ShapeDtypeStruct((B, C), jnp.float32),
        in_specs=[
            pl.BlockSpec(memory_space=pltpu.MemorySpace.VMEM),   # text  (N, 1)
            pl.BlockSpec(memory_space=pltpu.MemorySpace.VMEM),   # starts (B, 1)
            pl.BlockSpec(memory_space=pltpu.MemorySpace.VMEM),   # ends   (B, 1)
            pl.BlockSpec(memory_space=pltpu.MemorySpace.VMEM),   # emb    (V, Dp)
            pl.BlockSpec(memory_space=pltpu.MemorySpace.VMEM),   # fc weight (Dp, C)
            pl.BlockSpec(memory_space=pltpu.MemorySpace.VMEM),   # fc bias   (1, C)
        ],
        out_specs=pl.BlockSpec(memory_space=pltpu.MemorySpace.VMEM),
        compiler_params=pltpu.CompilerParams(vmem_limit_bytes=64 * 1024 * 1024),
    )(text2d, starts, ends, emb_p, w_p, fc_b.astype(jnp.float32))


def _reference(text, offsets, emb_table, fc_w_t, fc_b):
    """Pure-JAX reference of EmbeddingBag('mean') + Linear."""
    N = text.shape[0]
    ends = jnp.concatenate([offsets[1:], jnp.array([N], dtype=jnp.int32)])
    gathered = emb_table[text]                                    # (N, D)
    outs = []
    for b in range(offsets.shape[0]):
        s, e = int(offsets[b]), int(ends[b])
        cnt = max(e - s, 1)
        mean = gathered[s:e].sum(axis=0) / cnt if e > s else jnp.zeros(emb_table.shape[1])
        outs.append(mean)
    bags = jnp.stack(outs)                                        # (B, D)
    return bags @ fc_w_t + fc_b


if __name__ == "__main__":
    key = jax.random.PRNGKey(0)
    k_emb, k_tok, k_w = jax.random.split(key, 3)

    # Small synthetic shapes consistent with the module.
    VOCAB = 32          # includes prepended zero row at index 0
    EMB_DIM = 64        # pretrained_embeddings.shape[1]
    NUM_CLASS = 4       # AG_NEWS has 4 classes
    BATCH = 8           # number of bags
    N_TOKENS = 40       # total flattened tokens

    # Pretrained embeddings with zero row prepended (padding index 0).
    pretrained = jax.random.normal(k_emb, (VOCAB - 1, EMB_DIM), dtype=jnp.float32)
    emb_table = jnp.concatenate([jnp.zeros((1, EMB_DIM), jnp.float32), pretrained], axis=0)

    # fc: weight uniform(-0.5, 0.5), bias zeros (as in init_weights).
    fc_weight = jax.random.uniform(k_w, (NUM_CLASS, EMB_DIM), jnp.float32, -0.5, 0.5)
    fc_w_t = fc_weight.T                                          # (D, C) for the kernel
    fc_bias = jnp.zeros((1, NUM_CLASS), jnp.float32)

    # Flattened token ids (avoid padding id 0) and per-bag start offsets.
    text = jax.random.randint(k_tok, (N_TOKENS,), 1, VOCAB, dtype=jnp.int32)
    offsets = jnp.array([0, 5, 10, 16, 22, 27, 33, 37], dtype=jnp.int32)

    out = text_classification_forward(text, offsets, emb_table, fc_w_t, fc_bias)
    out = jax.block_until_ready(out)

    ref = _reference(text, offsets, emb_table, fc_w_t, fc_bias)
    assert out.shape == (BATCH, NUM_CLASS)
    assert jnp.allclose(out, ref, atol=1e-4, rtol=1e-4)

    print("KERNEL_OK")
</pallas_src>

<mosaic_0001>
module attributes {stable_mosaic.version = 11 : i64} {
  func.func @_embbag_fc_kernel(%arg0: memref<40x1xi32, #tpu.memory_space<vmem>>, %arg1: memref<8x1xi32, #tpu.memory_space<vmem>>, %arg2: memref<8x1xi32, #tpu.memory_space<vmem>>, %arg3: memref<32x128xf32, #tpu.memory_space<vmem>>, %arg4: memref<128x4xf32, #tpu.memory_space<vmem>>, %arg5: memref<1x4xf32, #tpu.memory_space<vmem>>, %arg6: memref<8x4xf32, #tpu.memory_space<vmem>>) attributes {dimension_semantics = [], scalar_prefetch = 0 : i64, scratch_operands = 0 : i64, tpu.core_type = #tpu.core_type<tc>} {
    %c0 = arith.constant 0 : index
    %c0_0 = arith.constant 0 : index
    %0 = vector.load %arg0[%c0, %c0_0] : memref<40x1xi32, #tpu.memory_space<vmem>>, vector<40x1xi32>
    %1 = tpu.iota {dimensions = array<i32: 1>} : vector<40x32xi32>
    %2 = vector.broadcast %0 : vector<40x1xi32> to vector<40x32xi32>
    %3 = arith.cmpi eq, %1, %2 : vector<40x32xi32>
    %4 = arith.extui %3 : vector<40x32xi1> to vector<40x32xi32>
    %5 = arith.sitofp %4 : vector<40x32xi32> to vector<40x32xf32>
    %c0_1 = arith.constant 0 : index
    %c0_2 = arith.constant 0 : index
    %6 = vector.load %arg3[%c0_1, %c0_2] : memref<32x128xf32, #tpu.memory_space<vmem>>, vector<32x128xf32>
    %cst = arith.constant dense<0.000000e+00> : vector<40x128xf32>
    %7 = tpu.matmul %5, %6, %cst {dimension_numbers = #tpu.dot_dimension_numbers<[1], [0], [0], [1], [0, 0, 1, 1], [], []>} : vector<40x32xf32>, vector<32x128xf32>, vector<40x128xf32> -> vector<40x128xf32>
    %8 = tpu.iota {dimensions = array<i32: 1>} : vector<8x40xi32>
    %c0_3 = arith.constant 0 : index
    %c0_4 = arith.constant 0 : index
    %9 = vector.load %arg1[%c0_3, %c0_4] : memref<8x1xi32, #tpu.memory_space<vmem>>, vector<8x1xi32>
    %c0_5 = arith.constant 0 : index
    %c0_6 = arith.constant 0 : index
    %10 = vector.load %arg2[%c0_5, %c0_6] : memref<8x1xi32, #tpu.memory_space<vmem>>, vector<8x1xi32>
    %11 = arith.subi %10, %9 : vector<8x1xi32>
    %12 = arith.sitofp %11 : vector<8x1xi32> to vector<8x1xf32>
    %cst_7 = arith.constant 0.000000e+00 : f32
    %13 = vector.broadcast %cst_7 : f32 to vector<8x1xf32>
    %14 = arith.cmpf ogt, %12, %13 : vector<8x1xf32>
    %cst_8 = arith.constant 1.000000e+00 : f32
    %cst_9 = arith.constant 0.000000e+00 : f32
    %15 = vector.broadcast %cst_8 : f32 to vector<8x1xf32>
    %16 = vector.broadcast %cst_9 : f32 to vector<8x1xf32>
    %17 = arith.select %14, %15, %16 : vector<8x1xi1>, vector<8x1xf32>
    %cst_10 = arith.constant 1.000000e+00 : f32
    %18 = vector.broadcast %cst_10 : f32 to vector<8x1xf32>
    %19 = arith.maximumf %12, %18 : vector<8x1xf32>
    %20 = arith.divf %17, %19 : vector<8x1xf32>
    %21 = vector.broadcast %9 : vector<8x1xi32> to vector<8x40xi32>
    %22 = arith.cmpi sge, %8, %21 : vector<8x40xi32>
    %23 = vector.broadcast %10 : vector<8x1xi32> to vector<8x40xi32>
    %24 = arith.cmpi slt, %8, %23 : vector<8x40xi32>
    %25 = arith.andi %22, %24 : vector<8x40xi1>
    %26 = arith.extui %25 : vector<8x40xi1> to vector<8x40xi32>
    %27 = arith.sitofp %26 : vector<8x40xi32> to vector<8x40xf32>
    %28 = vector.broadcast %20 : vector<8x1xf32> to vector<8x40xf32>
    %29 = arith.mulf %27, %28 : vector<8x40xf32>
    %cst_11 = arith.constant dense<0.000000e+00> : vector<8x128xf32>
    %30 = tpu.matmul %29, %7, %cst_11 {dimension_numbers = #tpu.dot_dimension_numbers<[1], [0], [0], [1], [0, 0, 1, 1], [], []>} : vector<8x40xf32>, vector<40x128xf32>, vector<8x128xf32> -> vector<8x128xf32>
    %c0_12 = arith.constant 0 : index
    %c0_13 = arith.constant 0 : index
    %31 = vector.load %arg4[%c0_12, %c0_13] : memref<128x4xf32, #tpu.memory_space<vmem>>, vector<128x4xf32>
    %cst_14 = arith.constant dense<0.000000e+00> : vector<8x4xf32>
    %32 = tpu.matmul %30, %31, %cst_14 {dimension_numbers = #tpu.dot_dimension_numbers<[1], [0], [0], [1], [0, 0, 1, 1], [], []>} : vector<8x128xf32>, vector<128x4xf32>, vector<8x4xf32> -> vector<8x4xf32>
    %c0_15 = arith.constant 0 : index
    %c0_16 = arith.constant 0 : index
    %33 = vector.load %arg5[%c0_15, %c0_16] : memref<1x4xf32, #tpu.memory_space<vmem>>, vector<1x4xf32>
    %34 = vector.broadcast %33 : vector<1x4xf32> to vector<8x4xf32>
    %35 = arith.addf %32, %34 : vector<8x4xf32>
    %c0_17 = arith.constant 0 : index
    %c0_18 = arith.constant 0 : index
    %36 = vector.load %arg6[%c0_17, %c0_18] : memref<8x4xf32, #tpu.memory_space<vmem>>, vector<8x4xf32>
    tpu.vector_store %arg6[%c0_17, %c0_18], %35 {strides = array<i32>} : memref<8x4xf32, #tpu.memory_space<vmem>>, vector<8x4xf32>,
    return
  }
}

</mosaic_0001>

<llo_original>
// kernel: tpu_custom_call.1
$region0: #{tpu_custom_call.1}
  #allocation0 [shape = 'u32[]', space=smem, size = 0x4, offset = 0x4, fixed_abs, tag = 'smem constant byte address 0x4 - core index']
  #allocation1 [shape = 'u32[144,128]{1,0:T(1,128)}', space=vmem, size = 0x12000, scoped, tag = 'internal scratch']
  %s0 = inlined_call_operand.hbm [shape: s32[40,1], index: 0, kind: input, shape index: {}]
  %s1 = inlined_call_operand.hbm [shape: s32[8,1], index: 1, kind: input, shape index: {}]
  %s2 = inlined_call_operand.hbm [shape: s32[8,1], index: 2, kind: input, shape index: {}]
  %s3 = inlined_call_operand.hbm [shape: f32[32,128], index: 3, kind: input, shape index: {}]
  %s4 = inlined_call_operand.hbm [shape: f32[128,4], index: 4, kind: input, shape index: {}]
  %s5 = inlined_call_operand.hbm [shape: f32[1,4], index: 5, kind: input, shape index: {}]
  %s6 = inlined_call_operand.hbm [shape: f32[8,4], index: 6, kind: output, shape index: {}]
  %s7 = sld [smem:[#allocation0]]
  $region58: #{tpu_custom_call.1} parent=0
    _
  %s9 = ssub.s32 1, %s7
  %s10 = scalar_select 0, %s9, %s7
  $region1: #{tpu_custom_call.1} parent=0
    #allocation2 [shape = 'u8[20480]{0}', space=vmem, size = 0x5000, scoped, tag = 'input window, operand 0, single buffered']
    #allocation3 [shape = 's32[1]{0}', space=sflag, size = 0x4, scoped, tag = 'scoped memory for tpu_custom_call.1']
    #allocation4 [shape = 's32[1]{0}', space=sflag, size = 0x4, scoped, tag = 'scoped memory for tpu_custom_call.1']
    #allocation5 [shape = 'u8[4096]{0}', space=vmem, size = 0x1000, scoped, tag = 'input window, operand 1, single buffered']
    #allocation6 [shape = 's32[1]{0}', space=sflag, size = 0x4, scoped, tag = 'scoped memory for tpu_custom_call.1']
    #allocation7 [shape = 'u8[4096]{0}', space=vmem, size = 0x1000, scoped, tag = 'input window, operand 2, single buffered']
    #allocation8 [shape = 'u8[16384]{0}', space=vmem, size = 0x4000, scoped, tag = 'input window, operand 3, single buffered']
    #allocation9 [shape = 's32[1]{0}', space=sflag, size = 0x4, scoped, tag = 'scoped memory for tpu_custom_call.1']
    #allocation10 [shape = 'u8[65536]{0}', space=vmem, size = 0x10000, scoped, tag = 'input window, operand 4, single buffered']
    #allocation11 [shape = 'u8[512]{0}', space=vmem, size = 0x400, scoped, tag = 'input window, operand 5, single buffered']
    #allocation12 [shape = 's32[1]{0}', space=sflag, size = 0x4, scoped, tag = 'scoped memory for tpu_custom_call.1']
    #allocation13 [shape = 'u8[4096]{0}', space=vmem, size = 0x1000, scoped, tag = 'output window, operand 0, single buffered']
    %11 = vsyncpa [#allocation3], 0
    %12 = vsyncpa [#allocation6], 0
    %13 = vsyncpa [#allocation9], 0
    %14 = vsyncpa [#allocation12], 0
    %15 = vsyncpa [#allocation4], 0
    // Predicated region
    $region2: #{tpu_custom_call.1} parent=1 // pred_check
      _
    $region3: #{tpu_custom_call.1} parent=1 // pred_check_branch
      %17 = sbr.rel (0) target = $region5
    $region4: #{tpu_custom_call.1} parent=1 // pred_region
      %s19 = ssub.s32 640, 640
      %20 = vsyncadd [#allocation3], %s19
      %s21 = sshll.u32 [#allocation2], 4
      %s22 = int_to_ptr.vmem [resolvable:$true] %s21
      %27 = dma.hbm_to_vmem [thread:$0]  %s0, 640, %s22, [#allocation3], 128, 128, 8
    $region5: #{tpu_custom_call.1} parent=1 // pred_fallthru
      _
    // Predicated region
    $region6: #{tpu_custom_call.1} parent=1 // pred_check
      _
    $region7: #{tpu_custom_call.1} parent=1 // pred_check_branch
      %29 = sbr.rel (0) target = $region9
    $region8: #{tpu_custom_call.1} parent=1 // pred_region
      %s31 = ssub.s32 128, 128
      %32 = vsyncadd [#allocation6], %s31
      %s34 = sshll.u32 [#allocation5], 4
      %s35 = int_to_ptr.vmem [resolvable:$true] %s34
      %37 = dma.hbm_to_vmem [thread:$0]  %s1, 128, %s35, [#allocation6]
    $region9: #{tpu_custom_call.1} parent=1 // pred_fallthru
      _
    // Predicated region
    $region10: #{tpu_custom_call.1} parent=1 // pred_check
      _
    $region11: #{tpu_custom_call.1} parent=1 // pred_check_branch
      %39 = sbr.rel (0) target = $region13
    $region12: #{tpu_custom_call.1} parent=1 // pred_region
      %s41 = ssub.s32 128, 128
      %42 = vsyncadd [#allocation6], %s41
      %s44 = sshll.u32 [#allocation7], 4
      %s45 = int_to_ptr.vmem [resolvable:$true] %s44
      %47 = dma.hbm_to_vmem [thread:$0]  %s2, 128, %s45, [#allocation6]
    $region13: #{tpu_custom_call.1} parent=1 // pred_fallthru
      _
    // Predicated region
    $region14: #{tpu_custom_call.1} parent=1 // pred_check
      _
    $region15: #{tpu_custom_call.1} parent=1 // pred_check_branch
      %49 = sbr.rel (0) target = $region17
    $region16: #{tpu_custom_call.1} parent=1 // pred_region
      %s51 = ssub.s32 512, 512
      %52 = vsyncadd [#allocation9], %s51
      %s53 = sshll.u32 [#allocation8], 4
      %s54 = int_to_ptr.vmem [resolvable:$true] %s53
      %59 = dma.hbm_to_vmem [thread:$0]  %s3, 512, %s54, [#allocation9], 128, 128, 8
    $region17: #{tpu_custom_call.1} parent=1 // pred_fallthru
      _
    // Predicated region
    $region18: #{tpu_custom_call.1} parent=1 // pred_check
      _
    $region19: #{tpu_custom_call.1} parent=1 // pred_check_branch
      %61 = sbr.rel (0) target = $region21
    $region20: #{tpu_custom_call.1} parent=1 // pred_region
      %s63 = ssub.s32 2048, 2048
      %64 = vsyncadd [#allocation9], %s63
      %s65 = sshll.u32 [#allocation10], 4
      %s66 = int_to_ptr.vmem [resolvable:$true] %s65
      %71 = dma.hbm_to_vmem [thread:$0]  %s4, 2048, %s66, [#allocation9], 128, 128, 8
    $region21: #{tpu_custom_call.1} parent=1 // pred_fallthru
      _
    // Predicated region
    $region22: #{tpu_custom_call.1} parent=1 // pred_check
      _
    $region23: #{tpu_custom_call.1} parent=1 // pred_check_branch
      %73 = sbr.rel (0) target = $region25
    $region24: #{tpu_custom_call.1} parent=1 // pred_region
      %s75 = ssub.s32 16, 16
      %76 = vsyncadd [#allocation12], %s75
      %s78 = sshll.u32 [#allocation11], 4
      %s79 = int_to_ptr.vmem [resolvable:$true] %s78
      %81 = dma.hbm_to_vmem [thread:$0]  %s5, 16, %s79, [#allocation12]
    $region25: #{tpu_custom_call.1} parent=1 // pred_fallthru
      _
    // Predicated region
    $region26: #{tpu_custom_call.1} parent=1 // pred_check
      _
    $region27: #{tpu_custom_call.1} parent=1 // pred_check_branch
      %83 = sbr.rel (0) target = $region29
    $region28: #{tpu_custom_call.1} parent=1 // pred_region
      %84 = dma.done [#allocation3], 640
    $region29: #{tpu_custom_call.1} parent=1 // pred_fallthru
      _
    // Predicated region
    $region30: #{tpu_custom_call.1} parent=1 // pred_check
      _
    $region31: #{tpu_custom_call.1} parent=1 // pred_check_branch
      %86 = sbr.rel (0) target = $region33
    $region32: #{tpu_custom_call.1} parent=1 // pred_region
      %87 = dma.done [#allocation6], 128
    $region33: #{tpu_custom_call.1} parent=1 // pred_fallthru
      _
    // Predicated region
    $region34: #{tpu_custom_call.1} parent=1 // pred_check
      _
    $region35: #{tpu_custom_call.1} parent=1 // pred_check_branch
      %89 = sbr.rel (0) target = $region37
    $region36: #{tpu_custom_call.1} parent=1 // pred_region
      %90 = dma.done [#allocation6], 128
    $region37: #{tpu_custom_call.1} parent=1 // pred_fallthru
      _
    // Predicated region
    $region38: #{tpu_custom_call.1} parent=1 // pred_check
      _
    $region39: #{tpu_custom_call.1} parent=1 // pred_check_branch
      %92 = sbr.rel (0) target = $region41
    $region40: #{tpu_custom_call.1} parent=1 // pred_region
      %93 = dma.done [#allocation9], 512
    $region41: #{tpu_custom_call.1} parent=1 // pred_fallthru
      _
    // Predicated region
    $region42: #{tpu_custom_call.1} parent=1 // pred_check
      _
    $region43: #{tpu_custom_call.1} parent=1 // pred_check_branch
      %95 = sbr.rel (0) target = $region45
    $region44: #{tpu_custom_call.1} parent=1 // pred_region
      %96 = dma.done [#allocation9], 2048
    $region45: #{tpu_custom_call.1} parent=1 // pred_fallthru
      _
    // Predicated region
    $region46: #{tpu_custom_call.1} parent=1 // pred_check
      _
    $region47: #{tpu_custom_call.1} parent=1 // pred_check_branch
      %98 = sbr.rel (0) target = $region49
    $region48: #{tpu_custom_call.1} parent=1 // pred_region
      %99 = dma.done [#allocation12], 16
    $region49: #{tpu_custom_call.1} parent=1 // pred_fallthru
      _
    %v100 = vld [vmem:[#allocation2] sm:$0xff]
    %v101 = vld [vmem:[#allocation2 + $0x8] sm:$0xff]
    %v102 = vld [vmem:[#allocation2 + $0x10] sm:$0xff]
    %v103 = vld [vmem:[#allocation2 + $0x18] sm:$0xff]
    %v104 = vld [vmem:[#allocation2 + $0x20] sm:$0xff]
    %v105 = vlaneseq
    %v106 = vand.u32 %v105, 127
    %107 = vset.pattern.permute.xlu0 0
    %108 = vperm.xlu0 %107, %v100
    %v109 = vpop.permute.xlu0 %108
    %110 = vset.pattern.permute.xlu0 0
    %111 = vperm.xlu0 %110, %v101
    %v112 = vpop.permute.xlu0 %111
    %113 = vset.pattern.permute.xlu0 0
    %114 = vperm.xlu0 %113, %v102
    %v115 = vpop.permute.xlu0 %114
    %116 = vset.pattern.permute.xlu0 0
    %117 = vperm.xlu0 %116, %v103
    %v118 = vpop.permute.xlu0 %117
    %119 = vset.pattern.permute.xlu0 0
    %120 = vperm.xlu0 %119, %v104
    %v121 = vpop.permute.xlu0 %120
    %vm122 = vcmp.eq.s32.totalorder %v106, %v109
    %vm123 = vcmp.eq.s32.totalorder %v106, %v112
    %vm124 = vcmp.eq.s32.totalorder %v106, %v115
    %vm125 = vcmp.eq.s32.totalorder %v106, %v118
    %vm126 = vcmp.eq.s32.totalorder %v106, %v121
    %v127 = vsel %vm122, 1, 0
    %v128 = vsel %vm123, 1, 0
    %v129 = vsel %vm124, 1, 0
    %v130 = vsel %vm125, 1, 0
    %v131 = vsel %vm126, 1, 0
    %v132 = vcvt.s32.f32 %v127
    %v133 = vcvt.s32.f32 %v128
    %v134 = vcvt.s32.f32 %v129
    %v135 = vcvt.s32.f32 %v130
    %v136 = vcvt.s32.f32 %v131
    %v137 = vld [vmem:[#allocation8] sm:$0xff]
    %v138 = vld [vmem:[#allocation8 + $0x8] sm:$0xff]
    %v139 = vld [vmem:[#allocation8 + $0x10] sm:$0xff]
    %v140 = vld [vmem:[#allocation8 + $0x18] sm:$0xff]
    %vm141 = vcmask 261120
    %v143 = vsel %vm141, %v132, 0
    %v146 = vsel %vm141, %v133, 0
    %v149 = vsel %vm141, %v134, 0
    %v152 = vsel %vm141, %v135, 0
    %v155 = vsel %vm141, %v136, 0
    %157 = vmatprep.subr.mxu0 0.0
    %158 = vmatpush1.msra.mxu0 %v137
    %159 = vmatprep.subr.mxu0 0.0
    %160 = vmatpush1.msra.mxu0 %v138
    %161 = vmatprep.subr.mxu0 0.0
    %162 = vmatpush1.msra.mxu0 %v139
    %163 = vmatprep.subr.mxu0 0.0
    %164 = vmatpush1.msra.mxu0 %v140
    %165 = vmatprep.subr.mxu0 0.0
    %166 = vmatpush1.msra.mxu0 0.0
    %167 = vmatprep.subr.mxu0 0.0
    %168 = vmatpush1.msra.mxu0 0.0
    %169 = vmatprep.subr.mxu0 0.0
    %170 = vmatpush1.msra.mxu0 0.0
    %171 = vmatprep.subr.mxu0 0.0
    %172 = vmatpush1.msra.mxu0 0.0
    %173 = vmatprep.subr.mxu0 0.0
    %174 = vmatpush1.msra.mxu0 0.0
    %175 = vmatprep.subr.mxu0 0.0
    %176 = vmatpush1.msra.mxu0 0.0
    %177 = vmatprep.subr.mxu0 0.0
    %178 = vmatpush1.msra.mxu0 0.0
    %179 = vmatprep.subr.mxu0 0.0
    %180 = vmatpush1.msra.mxu0 0.0
    %181 = vmatprep.subr.mxu0 0.0
    %182 = vmatpush1.msra.mxu0 0.0
    %183 = vmatprep.subr.mxu0 0.0
    %184 = vmatpush1.msra.mxu0 0.0
    %185 = vmatprep.subr.mxu0 0.0
    %186 = vmatpush1.msra.mxu0 0.0
    %187 = vmatprep.subr.mxu0 0.0
    %188 = vmatpush1.msra.mxu0 0.0
    %189 = vmatprep.subr.mxu0 0.0
    %190 = vmatpush1.msra.mxu0 0.0
    %191 = vmatprep.subr.mxu0 0.0
    %192 = vmatpush1.msra.mxu0 0.0
    %193 = vmatprep.subr.mxu0 0.0
    %194 = vmatpush1.msra.mxu0 0.0
    %195 = vmatprep.subr.mxu0 0.0
    %196 = vmatpush1.msra.mxu0 0.0
    %197 = vmatprep.subr.mxu0 0.0
    %198 = vmatpush1.msra.mxu0 0.0
    %199 = vmatprep.subr.mxu0 0.0
    %200 = vmatpush1.msra.mxu0 0.0
    %201 = vmatprep.subr.mxu0 0.0
    %202 = vmatpush1.msra.mxu0 0.0
    %203 = vmatprep.subr.mxu0 0.0
    %204 = vmatpush1.msra.mxu0 0.0
    %205 = vmatprep.subr.mxu0 0.0
    %206 = vmatpush1.msra.mxu0 0.0
    %207 = vmatprep.subr.mxu0 0.0
    %208 = vmatpush1.msra.mxu0 0.0
    %209 = vmatprep.subr.mxu0 0.0
    %210 = vmatpush1.msra.mxu0 0.0
    %211 = vmatprep.subr.mxu0 0.0
    %212 = vmatpush1.msra.mxu0 0.0
    %213 = vmatprep.subr.mxu0 0.0
    %214 = vmatpush1.msra.mxu0 0.0
    %215 = vmatprep.subr.mxu0 0.0
    %216 = vmatpush1.msra.mxu0 0.0
    %217 = vmatprep.subr.mxu0 0.0
    %218 = vmatpush1.msra.mxu0 0.0
    %219 = vmatprep.subr.mxu0 0.0
    %220 = vmatpush1.msra.mxu0 0.0
    %221 = vmatprep.mubr.f32.mxu0 0.0
    %222 = vmatmul.mubr.f32.gmra.mrb[0].mxu0 %v143
    %v223 = vpop.f32.mrb[0].mxu0
    %v224 = vadd.f32 0.0, %v223
    %v225 = vpop.f32.mrb[0].mxu0
    %226 = vmatprep.mubr.f32.mxu0 0.0
    %227 = vmatmul.mubr.f32.gmra.mrb[0].mxu0 %v146
    %v228 = vpop.f32.mrb[0].mxu0
    %v229 = vadd.f32 0.0, %v228
    %v230 = vpop.f32.mrb[0].mxu0
    %231 = vmatprep.mubr.f32.mxu0 0.0
    %232 = vmatmul.mubr.f32.gmra.mrb[0].mxu0 %v149
    %v233 = vpop.f32.mrb[0].mxu0
    %v234 = vadd.f32 0.0, %v233
    %v235 = vpop.f32.mrb[0].mxu0
    %236 = vmatprep.mubr.f32.mxu0 0.0
    %237 = vmatmul.mubr.f32.gmra.mrb[0].mxu0 %v152
    %v238 = vpop.f32.mrb[0].mxu0
    %v239 = vadd.f32 0.0, %v238
    %v240 = vpop.f32.mrb[0].mxu0
    %241 = vmatprep.mubr.f32.mxu0 0.0
    %242 = vmatmul.mubr.f32.gmra.mrb[0].mxu0 %v155
    %v243 = vpop.f32.mrb[0].mxu0
    %v244 = vadd.f32 0.0, %v243
    %v245 = vpop.f32.mrb[0].mxu0
    %246 = vdwg.mxu0
    %v247 = vld [vmem:[#allocation5] sm:$0xff]
    %v248 = vld [vmem:[#allocation7] sm:$0xff]
    %v249 = vsub.s32 %v248, %v247
    %v250 = vcvt.s32.f32 %v249
    %vm251 = vcmp.gt.f32.partialorder %v250, 0.0
    %v252 = vsel %vm251, 1.0, 0.0
    %v253 = vmax.f32 %v250, 1.0
    %v254 = vrcp.pop %v253
    %v255 = vmul.f32 %v252, %v254
    %256 = vset.pattern.permute.xlu0 0
    %257 = vperm.xlu0 %256, %v247
    %v258 = vpop.permute.xlu0 %257
    %vm259 = vcmp.ge.s32.totalorder %v106, %v258
    %260 = vset.pattern.permute.xlu0 0
    %261 = vperm.xlu0 %260, %v248
    %v262 = vpop.permute.xlu0 %261
    %vm263 = vcmp.lt.s32.totalorder %v106, %v262
    %vm264 = vmand %vm259, %vm263
    %v265 = vsel %vm264, 1, 0
    %v266 = vcvt.s32.f32 %v265
    %268 = vset.pattern.permute.xlu0 0
    %269 = vperm.xlu0 %268, %v255
    %v270 = vpop.permute.xlu0 %269
    %v272 = vmul.f32 %v266, %v270
    %vm273 = vcmask 326656
    %v275 = vsel %vm273, %v272, 0
    %277 = vmatprep.subr.mxu0 0.0
    %278 = vmatpush1.msra.mxu0 %v224
    %279 = vmatprep.subr.mxu0 0.0
    %280 = vmatpush1.msra.mxu0 %v229
    %281 = vmatprep.subr.mxu0 0.0
    %282 = vmatpush1.msra.mxu0 %v234
    %283 = vmatprep.subr.mxu0 0.0
    %284 = vmatpush1.msra.mxu0 %v239
    %285 = vmatprep.subr.mxu0 0.0
    %286 = vmatpush1.msra.mxu0 %v244
    %287 = vmatprep.subr.mxu0 0.0
    %288 = vmatpush1.msra.mxu0 0.0
    %289 = vmatprep.subr.mxu0 0.0
    %290 = vmatpush1.msra.mxu0 0.0
    %291 = vmatprep.subr.mxu0 0.0
    %292 = vmatpush1.msra.mxu0 0.0
    %293 = vmatprep.subr.mxu0 0.0
    %294 = vmatpush1.msra.mxu0 0.0
    %295 = vmatprep.subr.mxu0 0.0
    %296 = vmatpush1.msra.mxu0 0.0
    %297 = vmatprep.subr.mxu0 0.0
    %298 = vmatpush1.msra.mxu0 0.0
    %299 = vmatprep.subr.mxu0 0.0
    %300 = vmatpush1.msra.mxu0 0.0
    %301 = vmatprep.subr.mxu0 0.0
    %302 = vmatpush1.msra.mxu0 0.0
    %303 = vmatprep.subr.mxu0 0.0
    %304 = vmatpush1.msra.mxu0 0.0
    %305 = vmatprep.subr.mxu0 0.0
    %306 = vmatpush1.msra.mxu0 0.0
    %307 = vmatprep.subr.mxu0 0.0
    %308 = vmatpush1.msra.mxu0 0.0
    %309 = vmatprep.subr.mxu0 0.0
    %310 = vmatpush1.msra.mxu0 0.0
    %311 = vmatprep.subr.mxu0 0.0
    %312 = vmatpush1.msra.mxu0 0.0
    %313 = vmatprep.subr.mxu0 0.0
    %314 = vmatpush1.msra.mxu0 0.0
    %315 = vmatprep.subr.mxu0 0.0
    %316 = vmatpush1.msra.mxu0 0.0
    %317 = vmatprep.subr.mxu0 0.0
    %318 = vmatpush1.msra.mxu0 0.0
    %319 = vmatprep.subr.mxu0 0.0
    %320 = vmatpush1.msra.mxu0 0.0
    %321 = vmatprep.subr.mxu0 0.0
    %322 = vmatpush1.msra.mxu0 0.0
    %323 = vmatprep.subr.mxu0 0.0
    %324 = vmatpush1.msra.mxu0 0.0
    %325 = vmatprep.subr.mxu0 0.0
    %326 = vmatpush1.msra.mxu0 0.0
    %327 = vmatprep.subr.mxu0 0.0
    %328 = vmatpush1.msra.mxu0 0.0
    %329 = vmatprep.subr.mxu0 0.0
    %330 = vmatpush1.msra.mxu0 0.0
    %331 = vmatprep.subr.mxu0 0.0
    %332 = vmatpush1.msra.mxu0 0.0
    %333 = vmatprep.subr.mxu0 0.0
    %334 = vmatpush1.msra.mxu0 0.0
    %335 = vmatprep.subr.mxu0 0.0
    %336 = vmatpush1.msra.mxu0 0.0
    %337 = vmatprep.subr.mxu0 0.0
    %338 = vmatpush1.msra.mxu0 0.0
    %339 = vmatprep.subr.mxu0 0.0
    %340 = vmatpush1.msra.mxu0 0.0
    %341 = vmatprep.mubr.f32.mxu0 0.0
    %342 = vmatmul.mubr.f32.gmra.mrb[0].mxu0 %v275
    %v343 = vpop.f32.mrb[0].mxu0
    %v344 = vadd.f32 0.0, %v343
    %v345 = vpop.f32.mrb[0].mxu0
    %346 = vdwg.mxu0
    %v347 = vld [vmem:[#allocation10] sm:$0xff]
    %v348 = vld [vmem:[#allocation10 + $0x8] sm:$0xff]
    %v349 = vld [vmem:[#allocation10 + $0x10] sm:$0xff]
    %v350 = vld [vmem:[#allocation10 + $0x18] sm:$0xff]
    %v351 = vld [vmem:[#allocation10 + $0x20] sm:$0xff]
    %v352 = vld [vmem:[#allocation10 + $0x28] sm:$0xff]
    %v353 = vld [vmem:[#allocation10 + $0x30] sm:$0xff]
    %v354 = vld [vmem:[#allocation10 + $0x38] sm:$0xff]
    %v355 = vld [vmem:[#allocation10 + $0x40] sm:$0xff]
    %v356 = vld [vmem:[#allocation10 + $0x48] sm:$0xff]
    %v357 = vld [vmem:[#allocation10 + $0x50] sm:$0xff]
    %v358 = vld [vmem:[#allocation10 + $0x58] sm:$0xff]
    %v359 = vld [vmem:[#allocation10 + $0x60] sm:$0xff]
    %v360 = vld [vmem:[#allocation10 + $0x68] sm:$0xff]
    %v361 = vld [vmem:[#allocation10 + $0x70] sm:$0xff]
    %v362 = vld [vmem:[#allocation10 + $0x78] sm:$0xff]
    %v363 = vld [vmem:[#allocation11] sm:$0x1]
    %v365 = vlaneseq
    %v366 = vshrl.u32 %v365, 7
    %v367 = vsub.s32 0, %v366
    %v368 = vrot.slane %v363, %v367
    %370 = vmatprep.subr.mxu0 0.0
    %371 = vmatpush1.msra.mxu0 %v347
    %372 = vmatprep.subr.mxu0 0.0
    %373 = vmatpush1.msra.mxu0 %v348
    %374 = vmatprep.subr.mxu0 0.0
    %375 = vmatpush1.msra.mxu0 %v349
    %376 = vmatprep.subr.mxu0 0.0
    %377 = vmatpush1.msra.mxu0 %v350
    %378 = vmatprep.subr.mxu0 0.0
    %379 = vmatpush1.msra.mxu0 %v351
    %380 = vmatprep.subr.mxu0 0.0
    %381 = vmatpush1.msra.mxu0 %v352
    %382 = vmatprep.subr.mxu0 0.0
    %383 = vmatpush1.msra.mxu0 %v353
    %384 = vmatprep.subr.mxu0 0.0
    %385 = vmatpush1.msra.mxu0 %v354
    %386 = vmatprep.subr.mxu0 0.0
    %387 = vmatpush1.msra.mxu0 %v355
    %388 = vmatprep.subr.mxu0 0.0
    %389 = vmatpush1.msra.mxu0 %v356
    %390 = vmatprep.subr.mxu0 0.0
    %391 = vmatpush1.msra.mxu0 %v357
    %392 = vmatprep.subr.mxu0 0.0
    %393 = vmatpush1.msra.mxu0 %v358
    %394 = vmatprep.subr.mxu0 0.0
    %395 = vmatpush1.msra.mxu0 %v359
    %396 = vmatprep.subr.mxu0 0.0
    %397 = vmatpush1.msra.mxu0 %v360
    %398 = vmatprep.subr.mxu0 0.0
    %399 = vmatpush1.msra.mxu0 %v361
    %400 = vmatprep.subr.mxu0 0.0
    %401 = vmatpush1.msra.mxu0 %v362
    %402 = vmatprep.subr.mxu0 0.0
    %403 = vmatpush1.msra.mxu0 0.0
    %404 = vmatprep.subr.mxu0 0.0
    %405 = vmatpush1.msra.mxu0 0.0
    %406 = vmatprep.subr.mxu0 0.0
    %407 = vmatpush1.msra.mxu0 0.0
    %408 = vmatprep.subr.mxu0 0.0
    %409 = vmatpush1.msra.mxu0 0.0
    %410 = vmatprep.subr.mxu0 0.0
    %411 = vmatpush1.msra.mxu0 0.0
    %412 = vmatprep.subr.mxu0 0.0
    %413 = vmatpush1.msra.mxu0 0.0
    %414 = vmatprep.subr.mxu0 0.0
    %415 = vmatpush1.msra.mxu0 0.0
    %416 = vmatprep.subr.mxu0 0.0
    %417 = vmatpush1.msra.mxu0 0.0
    %418 = vmatprep.subr.mxu0 0.0
    %419 = vmatpush1.msra.mxu0 0.0
    %420 = vmatprep.subr.mxu0 0.0
    %421 = vmatpush1.msra.mxu0 0.0
    %422 = vmatprep.subr.mxu0 0.0
    %423 = vmatpush1.msra.mxu0 0.0
    %424 = vmatprep.subr.mxu0 0.0
    %425 = vmatpush1.msra.mxu0 0.0
    %426 = vmatprep.subr.mxu0 0.0
    %427 = vmatpush1.msra.mxu0 0.0
    %428 = vmatprep.subr.mxu0 0.0
    %429 = vmatpush1.msra.mxu0 0.0
    %430 = vmatprep.subr.mxu0 0.0
    %431 = vmatpush1.msra.mxu0 0.0
    %432 = vmatprep.subr.mxu0 0.0
    %433 = vmatpush1.msra.mxu0 0.0
    %434 = vmatprep.mubr.f32.mxu0 0.0
    %435 = vmatmul.mubr.f32.gmra.mrb[0].mxu0 %v344
    %v436 = vpop.f32.mrb[0].mxu0
    %v437 = vadd.f32 %v368, %v436
    %v438 = vpop.f32.mrb[0].mxu0
    %439 = vdwg.mxu0
    %vm440 = vcmask 31744
    %441 = vst.msk [vmem:[#allocation13] sm:$0xff] %vm440, %v437
    // Predicated region
    $region50: #{tpu_custom_call.1} parent=1 // pred_check
      _
    $region51: #{tpu_custom_call.1} parent=1 // pred_check_branch
      %443 = sbr.rel (0) target = $region53
    $region52: #{tpu_custom_call.1} parent=1 // pred_region
      %s445 = ssub.s32 128, 128
      %446 = vsyncadd [#allocation4], %s445
      %s448 = sshll.u32 [#allocation13], 4
      %s449 = int_to_ptr.vmem [resolvable:$true] %s448
      %451 = dma.vmem_to_hbm [thread:$0]  %s449, 128, %s6, [#allocation4]
    $region53: #{tpu_custom_call.1} parent=1 // pred_fallthru
      _
    // Predicated region
    $region54: #{tpu_custom_call.1} parent=1 // pred_check
      _
    $region55: #{tpu_custom_call.1} parent=1 // pred_check_branch
      %453 = sbr.rel (0) target = $region57
    $region56: #{tpu_custom_call.1} parent=1 // pred_region
      %454 = dma.done [#allocation4], 128
    $region57: #{tpu_custom_call.1} parent=1 // pred_fallthru
      _
    %455 = vsyncpa [#allocation3], 1
    %456 = vsyncpa [#allocation6], 1
    %457 = vsyncpa [#allocation9], 1
    %458 = vsyncpa [#allocation12], 1
    %459 = vsyncpa [#allocation4], 1

</llo_original>
